<compile_context>
chip_gen: v6e
topology: v6e:2x2x1
jax: 0.10.0
libtpu: 0.0.40
codegen_flags: <defaults>
</compile_context>

<pallas_src>
import functools

import jax
import jax.numpy as jnp
from jax.experimental import pallas as pl
from jax.experimental.pallas import tpu as pltpu


# ----------------------------------------------------------------------------
# helpers
# ----------------------------------------------------------------------------
def _round_up(n, m):
    return ((n + m - 1) // m) * m


def _pick_block_rows(requested, n_rows, d, n_buffers, bytes_budget=24 << 20):
    """Largest multiple-of-8 row tile such that n_buffers double-buffered copies
    of (block_rows, d) f32 stay under `bytes_budget` (safe for v7x's 64 MiB VMEM)."""
    per_row_bytes = d * 4 * n_buffers
    cap = max(8, (bytes_budget // max(per_row_bytes, 1)) // 8 * 8)
    br = min(requested, cap)
    br = min(br, _round_up(n_rows, 8))   # don't tile past the (padded) data
    return max(8, br)


# ----------------------------------------------------------------------------
# Kernel 1: torch-style LayerNormalization (unbiased std, scalar alpha/bias,
#           normalize by (std + eps)).
# ----------------------------------------------------------------------------
def _layernorm_kernel(x_ref, alpha_ref, bias_ref, o_ref, *, eps, d):
    x = x_ref[...].astype(jnp.float32)                       # (block_rows, D)
    row_sum = jnp.sum(x, axis=-1, keepdims=True)             # one reduction
    mean = row_sum * jnp.float32(1.0 / d)
    diff = x - mean
    var = jnp.sum(diff * diff, axis=-1, keepdims=True) * jnp.float32(1.0 / (d - 1))
    std = jnp.sqrt(var)
    a = alpha_ref[0]                                          # scalar param
    b = bias_ref[0]                                           # scalar param
    # One divide per ROW (a (rows,1) column), then per-element multiply+add.
    scale = a / (std + jnp.float32(eps))
    o_ref[...] = (diff * scale + b).astype(o_ref.dtype)


def layer_norm_pallas(x, alpha, bias, eps=1e-6, block_rows=512):
    """x: (..., D) -> LayerNormalization(x) with torch semantics."""
    orig_shape = x.shape
    D = orig_shape[-1]
    R = 1
    for s in orig_shape[:-1]:
        R *= s
    xf = x.reshape(R, D)

    # 2 input buffers + 2 output buffers of the tile live in VMEM.
    br = _pick_block_rows(block_rows, R, D, n_buffers=4)
    Rp = _round_up(R, br)
    if Rp != R:
        xf = jnp.pad(xf, ((0, Rp - R), (0, 0)))               # padded rows -> harmless

    out = pl.pallas_call(
        functools.partial(_layernorm_kernel, eps=eps, d=D),
        out_shape=jax.ShapeDtypeStruct((Rp, D), x.dtype),
        grid=(Rp // br,),
        in_specs=[
            pl.BlockSpec((br, D), lambda i: (i, 0)),           # x rows in VMEM
            pl.BlockSpec(memory_space=pltpu.SMEM),             # alpha (1,)
            pl.BlockSpec(memory_space=pltpu.SMEM),             # bias  (1,)
        ],
        out_specs=pl.BlockSpec((br, D), lambda i: (i, 0)),
        compiler_params=pltpu.CompilerParams(
            dimension_semantics=("parallel",),
            vmem_limit_bytes=64 << 20),
    )(xf, alpha, bias)

    if Rp != R:
        out = out[:R]
    return out.reshape(orig_shape)


# ----------------------------------------------------------------------------
# Kernel 2: fused residual add   out = x + y
# (dropout in eval mode is identity, so the residual stage is just an add).
# ----------------------------------------------------------------------------
def _residual_add_kernel(x_ref, y_ref, o_ref):
    o_ref[...] = x_ref[...] + y_ref[...]


def residual_add_pallas(x, y, block_rows=512):
    orig_shape = x.shape
    D = orig_shape[-1]
    R = 1
    for s in orig_shape[:-1]:
        R *= s
    xf = x.reshape(R, D)
    yf = y.reshape(R, D)

    # 2 inputs + 1 output, each double-buffered -> 6 tile copies in VMEM.
    br = _pick_block_rows(block_rows, R, D, n_buffers=6)
    Rp = _round_up(R, br)
    if Rp != R:
        pad = ((0, Rp - R), (0, 0))
        xf = jnp.pad(xf, pad)
        yf = jnp.pad(yf, pad)

    out = pl.pallas_call(
        _residual_add_kernel,
        out_shape=jax.ShapeDtypeStruct((Rp, D), x.dtype),
        grid=(Rp // br,),
        in_specs=[
            pl.BlockSpec((br, D), lambda i: (i, 0)),
            pl.BlockSpec((br, D), lambda i: (i, 0)),
        ],
        out_specs=pl.BlockSpec((br, D), lambda i: (i, 0)),
        compiler_params=pltpu.CompilerParams(
            dimension_semantics=("parallel",),
            vmem_limit_bytes=64 << 20),
    )(xf, yf)

    if Rp != R:
        out = out[:R]
    return out.reshape(orig_shape)


# ----------------------------------------------------------------------------
# ResidualConnection.forward
# ----------------------------------------------------------------------------
def residual_connection_forward(x, sublayer, alpha, bias, eps=1e-6,
                                dropout_rate=0.1, training=False):
    """return x + dropout(sublayer(norm(x)))  (dropout: identity in eval mode)."""
    normed = layer_norm_pallas(x, alpha, bias, eps)
    sub_out = sublayer(normed)                 # opaque sublayer (attention / FFN / ...)
    # TODO(synk): training-mode dropout (pltpu.prng_seed / prng_random_bits mask +
    #             1/(1-p) rescale); eval-mode dropout is identity, matching nn.Dropout.eval().
    del dropout_rate, training
    return residual_add_pallas(x, sub_out)


# The concrete sublayer is passed in as a callable in the PyTorch code; the demo
# uses an identity sublayer.
def identity_sublayer(x):
    return x


if __name__ == "__main__":
    key = jax.random.PRNGKey(0)
    B, S, D = 2, 8, 128                       # batch, seq_len, d_model (lane-dense D)
    x = jax.random.normal(key, (B, S, D), dtype=jnp.float32)

    # LayerNormalization.__init__: alpha = ones(1), bias = zeros(1)  (deterministic)
    alpha = jnp.ones((1,), dtype=jnp.float32)
    bias = jnp.zeros((1,), dtype=jnp.float32)

    out = residual_connection_forward(x, identity_sublayer, alpha, bias, eps=1e-6)
    out = jax.block_until_ready(out)

    # Pure-JAX reference (torch semantics: unbiased std, scalar alpha/bias,
    # eval-mode dropout = identity).
    mean = jnp.mean(x, axis=-1, keepdims=True)
    std = jnp.sqrt(jnp.sum((x - mean) ** 2, axis=-1, keepdims=True) / (D - 1))
    normed_ref = alpha[0] * (x - mean) / (std + 1e-6) + bias[0]
    ref = x + identity_sublayer(normed_ref)

    assert out.shape == (B, S, D)
    assert jnp.allclose(out, ref, atol=1e-5, rtol=1e-5), "mismatch vs reference"
    print("KERNEL_OK")
</pallas_src>

<mosaic_0001>
module attributes {stable_mosaic.version = 11 : i64} {
  func.func @_layernorm_kernel(%arg0: i32, %arg1: memref<16x128xf32, #tpu.memory_space<vmem>>, %arg2: memref<1xf32, #tpu.memory_space<smem>>, %arg3: memref<1xf32, #tpu.memory_space<smem>>, %arg4: memref<16x128xf32, #tpu.memory_space<vmem>>) attributes {dimension_semantics = [#tpu.dimension_semantics<parallel>], iteration_bounds = array<i64: 1>, scalar_prefetch = 0 : i64, scratch_operands = 0 : i64, tpu.core_type = #tpu.core_type<tc>, window_params = [{transform_indices = @transform_0, window_bounds = array<i64: 16, 128>}, {transform_indices = @transform_1, window_bounds = array<i64: 1>}, {transform_indices = @transform_2, window_bounds = array<i64: 1>}, {transform_indices = @transform_3, window_bounds = array<i64: 16, 128>}]} {
    %c0 = arith.constant 0 : index
    %c0_0 = arith.constant 0 : index
    %0 = vector.load %arg1[%c0, %c0_0] : memref<16x128xf32, #tpu.memory_space<vmem>>, vector<16x128xf32>
    %cst = arith.constant dense<0.000000e+00> : vector<16xf32>
    %1 = vector.multi_reduction <add>, %0, %cst [1] : vector<16x128xf32> to vector<16xf32>
    %2 = vector.shape_cast %1 : vector<16xf32> to vector<16x1xf32>
    %cst_1 = arith.constant 7.812500e-03 : f32
    %3 = vector.broadcast %cst_1 : f32 to vector<16x1xf32>
    %4 = arith.mulf %2, %3 : vector<16x1xf32>
    %5 = vector.broadcast %4 : vector<16x1xf32> to vector<16x128xf32>
    %6 = arith.subf %0, %5 : vector<16x128xf32>
    %7 = arith.mulf %6, %6 : vector<16x128xf32>
    %cst_2 = arith.constant dense<0.000000e+00> : vector<16xf32>
    %8 = vector.multi_reduction <add>, %7, %cst_2 [1] : vector<16x128xf32> to vector<16xf32>
    %9 = vector.shape_cast %8 : vector<16xf32> to vector<16x1xf32>
    %cst_3 = arith.constant 0.00787401571 : f32
    %10 = vector.broadcast %cst_3 : f32 to vector<16x1xf32>
    %11 = arith.mulf %9, %10 : vector<16x1xf32>
    %12 = math.sqrt %11 : vector<16x1xf32>
    %c0_4 = arith.constant 0 : index
    %13 = memref.load %arg2[%c0_4] : memref<1xf32, #tpu.memory_space<smem>>
    %c0_5 = arith.constant 0 : index
    %14 = memref.load %arg3[%c0_5] : memref<1xf32, #tpu.memory_space<smem>>
    %cst_6 = arith.constant 9.99999997E-7 : f32
    %15 = vector.broadcast %cst_6 : f32 to vector<16x1xf32>
    %16 = arith.addf %12, %15 : vector<16x1xf32>
    %17 = vector.broadcast %13 : f32 to vector<16x1xf32>
    %18 = arith.divf %17, %16 : vector<16x1xf32>
    %19 = vector.broadcast %18 : vector<16x1xf32> to vector<16x128xf32>
    %20 = arith.mulf %6, %19 : vector<16x128xf32>
    %21 = vector.broadcast %14 : f32 to vector<16x128xf32>
    %22 = arith.addf %20, %21 : vector<16x128xf32>
    %c0_7 = arith.constant 0 : index
    %c0_8 = arith.constant 0 : index
    %23 = vector.load %arg4[%c0_7, %c0_8] : memref<16x128xf32, #tpu.memory_space<vmem>>, vector<16x128xf32>
    tpu.vector_store %arg4[%c0_7, %c0_8], %22 {strides = array<i32>} : memref<16x128xf32, #tpu.memory_space<vmem>>, vector<16x128xf32>,
    return
  }
  func.func @transform_0(%arg0: i32) -> (i32, i32) {
    %c0_i32 = arith.constant 0 : i32
    %c0_i32_0 = arith.constant 0 : i32
    return %arg0, %c0_i32 : i32, i32
  }
  func.func @transform_1(%arg0: i32) -> i32 {
    %c0_i32 = arith.constant 0 : i32
    %c0_i32_0 = arith.constant 0 : i32
    return %c0_i32 : i32
  }
  func.func @transform_2(%arg0: i32) -> i32 {
    %c0_i32 = arith.constant 0 : i32
    %c0_i32_0 = arith.constant 0 : i32
    return %c0_i32 : i32
  }
  func.func @transform_3(%arg0: i32) -> (i32, i32) {
    %c0_i32 = arith.constant 0 : i32
    %c0_i32_0 = arith.constant 0 : i32
    return %arg0, %c0_i32 : i32, i32
  }
}

</mosaic_0001>

<llo_original>
// kernel: tpu_custom_call.1
$region0: #{tpu_custom_call.1}
  #allocation0 [shape = 'u32[]', space=smem, size = 0x4, offset = 0x4, fixed_abs, tag = 'smem constant byte address 0x4 - core index']
  #allocation1 [shape = 'u32[144,128]{1,0:T(1,128)}', space=vmem, size = 0x12000, scoped, tag = 'internal scratch']
  #allocation2 [shape = 'f32[1]{0:T(128)S(6)}', space=smem, size = 0x200, scoped, tag = 'scoped memory for tpu_custom_call.1']
  #allocation3 [shape = 'f32[1]{0:T(128)S(6)}', space=smem, size = 0x200, scoped, tag = 'scoped memory for tpu_custom_call.1']
  %s0 = inlined_call_operand.hbm [shape: f32[16,128], index: 0, kind: input, shape index: {}]
  %s1 = inlined_call_operand.<no memory space> [shape: f32[1], index: 1, kind: input, shape index: {}]
  %s2 = inlined_call_operand.<no memory space> [shape: f32[1], index: 2, kind: input, shape index: {}]
  %s3 = inlined_call_operand.hbm [shape: f32[16,128], index: 3, kind: output, shape index: {}]
  %s4 = sld [smem:[#allocation0]]
  $region26: #{tpu_custom_call.1} parent=0
    _
  %s6 = ssub.s32 1, %s4
  %s7 = scalar_select 0, %s6, %s4
  %8 = sst [smem:[#allocation2]] %s1
  %9 = sst [smem:[#allocation3]] %s2
  $region1: #{tpu_custom_call.1} parent=0
    #allocation4 [shape = 'u8[8192]{0}', space=vmem, size = 0x2000, scoped, tag = 'input window, operand 0, single buffered']
    #allocation5 [shape = 's32[1]{0}', space=sflag, size = 0x4, scoped, tag = 'scoped memory for tpu_custom_call.1']
    #allocation6 [shape = 's32[1]{0}', space=sflag, size = 0x4, scoped, tag = 'scoped memory for tpu_custom_call.1']
    #allocation7 [shape = 'u8[8192]{0}', space=vmem, size = 0x2000, scoped, tag = 'output window, operand 0, single buffered']
    %10 = vsyncpa [#allocation5], 0
    %11 = vsyncpa [#allocation6], 0
    // Predicated region
    $region2: #{tpu_custom_call.1} parent=1 // pred_check
      _
    $region3: #{tpu_custom_call.1} parent=1 // pred_check_branch
      %13 = sbr.rel (0) target = $region5
    $region4: #{tpu_custom_call.1} parent=1 // pred_region
      %s15 = ssub.s32 256, 256
      %16 = vsyncadd [#allocation5], %s15
      %s17 = sshll.u32 [#allocation4], 4
      %s18 = int_to_ptr.vmem [resolvable:$true] %s17
      %23 = dma.hbm_to_vmem [thread:$0]  %s0, 256, %s18, [#allocation5], 128, 128, 8
    $region5: #{tpu_custom_call.1} parent=1 // pred_fallthru
      _
    // Predicated region
    $region6: #{tpu_custom_call.1} parent=1 // pred_check
      _
    $region7: #{tpu_custom_call.1} parent=1 // pred_check_branch
      %25 = sbr.rel (0) target = $region9
    $region8: #{tpu_custom_call.1} parent=1 // pred_region
      _
    $region9: #{tpu_custom_call.1} parent=1 // pred_fallthru
      _
    // Predicated region
    $region10: #{tpu_custom_call.1} parent=1 // pred_check
      _
    $region11: #{tpu_custom_call.1} parent=1 // pred_check_branch
      %27 = sbr.rel (0) target = $region13
    $region12: #{tpu_custom_call.1} parent=1 // pred_region
      _
    $region13: #{tpu_custom_call.1} parent=1 // pred_fallthru
      _
    // Predicated region
    $region14: #{tpu_custom_call.1} parent=1 // pred_check
      _
    $region15: #{tpu_custom_call.1} parent=1 // pred_check_branch
      %29 = sbr.rel (0) target = $region17
    $region16: #{tpu_custom_call.1} parent=1 // pred_region
      %30 = dma.done [#allocation5], 256
    $region17: #{tpu_custom_call.1} parent=1 // pred_fallthru
      _
    %v31 = vld [vmem:[#allocation4] sm:$0xff]
    %v32 = vld [vmem:[#allocation4 + $0x8] sm:$0xff]
    %33 = vadd.xlane.f32.xlu0 %v31
    %v34 = vpop.xlane.xlu0 %33
    %35 = vadd.xlane.f32.xlu0 %v32
    %v36 = vpop.xlane.xlu0 %35
    %v37 = vmul.f32 %v34, 0.0078125
    %v38 = vmul.f32 %v36, 0.0078125
    %v39 = vsub.f32 %v31, %v37
    %v40 = vsub.f32 %v32, %v38
    %v41 = vmul.f32 %v39, %v39
    %v42 = vmul.f32 %v40, %v40
    %43 = vadd.xlane.f32.xlu0 %v41
    %v44 = vpop.xlane.xlu0 %43
    %45 = vadd.xlane.f32.xlu0 %v42
    %v46 = vpop.xlane.xlu0 %45
    %v47 = vmul.f32 %v44, 0.007874016
    %v48 = vmul.f32 %v46, 0.007874016
    %v49 = vrsqrt.pop %v47
    %v50 = vmul.f32 %v47, %v49
    %vm51 = vcmp.eq.f32.partialorder %v47, inf
    %v52 = vsel %vm51, %v47, %v50
    %vm53 = vcmp.eq.f32.partialorder %v47, 0.0
    %v54 = vand.u32 %v47, 2147483648
    %v55 = vsel %vm53, %v54, %v52
    %v56 = vrsqrt.pop %v48
    %v57 = vmul.f32 %v48, %v56
    %vm58 = vcmp.eq.f32.partialorder %v48, inf
    %v59 = vsel %vm58, %v48, %v57
    %vm60 = vcmp.eq.f32.partialorder %v48, 0.0
    %v61 = vand.u32 %v48, 2147483648
    %v62 = vsel %vm60, %v61, %v59
    %s63 = sld [smem:[#allocation2]]
    %s64 = sld [smem:[#allocation3]]
    %v65 = vadd.f32 %v55, 1e-06
    %v66 = vadd.f32 %v62, 1e-06
    %v67 = vstv %s63
    %v68 = vrcp.pop %v65
    %v69 = vmul.f32 %v67, %v68
    %v70 = vrcp.pop %v66
    %v71 = vmul.f32 %v67, %v70
    %v72 = vmul.f32 %v39, %v69
    %v73 = vmul.f32 %v40, %v71
    %v74 = vstv %s64
    %v75 = vadd.f32 %v72, %v74
    %v76 = vadd.f32 %v73, %v74
    %77 = vst [vmem:[#allocation7] sm:$0xff] %v75
    %78 = vst [vmem:[#allocation7 + $0x8] sm:$0xff] %v76
    // Predicated region
    $region18: #{tpu_custom_call.1} parent=1 // pred_check
      _
    $region19: #{tpu_custom_call.1} parent=1 // pred_check_branch
      %80 = sbr.rel (0) target = $region21
    $region20: #{tpu_custom_call.1} parent=1 // pred_region
      %s82 = ssub.s32 256, 256
      %83 = vsyncadd [#allocation6], %s82
      %s84 = sshll.u32 [#allocation7], 4
      %s85 = int_to_ptr.vmem [resolvable:$true] %s84
      %90 = dma.vmem_to_hbm [thread:$0]  %s85, 256, %s3, [#allocation6], 128, 128, 8
    $region21: #{tpu_custom_call.1} parent=1 // pred_fallthru
      _
    // Predicated region
    $region22: #{tpu_custom_call.1} parent=1 // pred_check
      _
    $region23: #{tpu_custom_call.1} parent=1 // pred_check_branch
      %92 = sbr.rel (0) target = $region25
    $region24: #{tpu_custom_call.1} parent=1 // pred_region
      %93 = dma.done [#allocation6], 256
    $region25: #{tpu_custom_call.1} parent=1 // pred_fallthru
      _
    %94 = vsyncpa [#allocation5], 1
    %95 = vsyncpa [#allocation6], 1

</llo_original>
